<compile_context>
chip_gen: v6e
topology: v6e:2x2x1
jax: 0.10.0
libtpu: 0.0.40
codegen_flags: <defaults>
</compile_context>

<pallas_src>
import jax
import jax.numpy as jnp
from jax.experimental import pallas as pl
from jax.experimental.pallas import tpu as pltpu


# ----------------------------- synthetic config -----------------------------
class config:
    use_cuda = False
    use_flip = False
    use_res_shape = False
    use_shape_smooth = False
    use_face_recognition_constraint = False
    use_perceptual_loss = False
    use_confidence_map = False
    use_albedo_res = False
    mode = "default"
    mix_loss_weight_3d_vdc_lm = 1.0
    weight_res_landmark = 1.0
    weight_shape_smooth_loss = 1.0
    weight_pixel_loss = 1.0      # non-zero -> albedo reg/smooth/sharp losses computed
    weight_loss_perc_im = 0.0


# ----------------------------- problem sizes -----------------------------
N_BATCH = 2
NVER = 128            # mesh vertices  (3*NVER = 384, multiple of 128 lanes)
N_SHP = 99            # shape-coefficient dimension (3DDFA zero-pads to 99)
N_EXP = 29            # expression-coefficient dimension (99 + 29 = 128 = MXU depth)
H = W = 32            # UV albedo map resolution
C = 3                 # RGB


# =========================================================================
# Kernel 1: fused BFM vertex synthesis for BOTH morphable models.
#   V_f = mu_f + [a_shp_f | a_exp_f] @ [W_shp_f ; W_exp_f]      (K = 128)
#   V_g = mu_g + [a_shp_g | a_exp_g] @ [W_shp_g ; W_exp_g]
# Single block, no grid: everything is < 0.5 MiB of VMEM.
# =========================================================================
def _bfm_vertex_kernel(mu_f_ref, w_f_ref, a_f_ref,
                       mu_g_ref, w_g_ref, a_g_ref,
                       out_f_ref, out_g_ref):
    out_f_ref[...] = (jnp.dot(a_f_ref[...], w_f_ref[...],
                              preferred_element_type=jnp.float32)
                      + mu_f_ref[...])
    out_g_ref[...] = (jnp.dot(a_g_ref[...], w_g_ref[...],
                              preferred_element_type=jnp.float32)
                      + mu_g_ref[...])


def bfm_vertices_fused(mu_f, w_f, alpha_f, mu_g, w_g, alpha_g):
    n = alpha_f.shape[0]
    t3 = w_f.shape[1]
    return pl.pallas_call(
        _bfm_vertex_kernel,
        out_shape=(jax.ShapeDtypeStruct((n, t3), jnp.float32),
                   jax.ShapeDtypeStruct((n, t3), jnp.float32)),
    )(mu_f, w_f, alpha_f, mu_g, w_g, alpha_g)


# =========================================================================
# Kernel 2: fused smooth_loss + sharp_loss core.
# Reference: conv2d(x_NCHW, kernel.expand(C,C,3,3), pad=1); every (oc, ic)
# pair shares the SAME 3x3 kernel, so each output channel = conv3x3(sum_c x),
# and ((conv * mask)**2).sum() == C * sum((conv3x3(sum_c x) * m_hw)**2).
#
# Layout: both batch elements of the channel-summed 'a' map and 's' map are
# packed along the lane axis -> x:(H, 2*N*W).  Per-tap coefficient rows carry
# kernel_low in the 'a' lane groups and kernel_high in the 's' lane groups.
# Taps are built with pltpu.roll (circular); wrap-around only reaches
# mask-zero border rows/columns, so the result equals zero-padded conv2d.
# =========================================================================
def _dual_conv_loss_kernel(x_ref, m_ref, coef_ref, out_ref):
    x = x_ref[...]            # (H, L)
    m = m_ref[...]            # (H, L)
    cf = coef_ref[...]        # (9, L)
    h, l = x.shape

    y = jnp.zeros_like(x)
    t = 0
    for di in range(3):
        for dj in range(3):
            # conv2d(padding=1): out[i,j] += k[di,dj] * x[i+di-1, j+dj-1]
            s = x
            sr = (1 - di) % h
            sc = (1 - dj) % l
            if sr:
                s = pltpu.roll(s, shift=sr, axis=0)
            if sc:
                s = pltpu.roll(s, shift=sc, axis=1)
            y = y + cf[t:t + 1, :] * s
            t += 1

    sq = (y * m) ** 2
    out_ref[...] = jnp.sum(sq, axis=0, keepdims=True)   # (1, L) per-lane sums


def dual_masked_conv_sq_sum(packed_hw, mask_packed, coef):
    h, l = packed_hw.shape
    return pl.pallas_call(
        _dual_conv_loss_kernel,
        out_shape=jax.ShapeDtypeStruct((1, l), jnp.float32),
    )(packed_hw, mask_packed, coef)


# ----------------------------- plain-JAX glue -----------------------------
def _parse_param_batch(param):
    param = param.astype(jnp.float32)
    n = param.shape[0]
    p_ = param[:, :12].reshape(n, 3, 4)
    p = p_[:, :, :3]
    offset = p_[:, :, 3].reshape(n, 3, 1)
    alpha_shp = jnp.zeros((n, 99), jnp.float32).at[:, :40].set(param[:, 12:52])
    alpha_exp = jnp.zeros((n, 29), jnp.float32).at[:, :10].set(param[:, 52:62])
    return p, offset, alpha_shp, alpha_exp


def _euler_to_rot(angles):
    pitch, yaw, roll = angles[:, 0], angles[:, 1], angles[:, 2]
    cx, sx = jnp.cos(pitch), jnp.sin(pitch)
    cy, sy = jnp.cos(yaw), jnp.sin(yaw)
    cz, sz = jnp.cos(roll), jnp.sin(roll)
    one, zero = jnp.ones_like(cx), jnp.zeros_like(cx)
    rx = jnp.stack([jnp.stack([one, zero, zero], -1),
                    jnp.stack([zero, cx, -sx], -1),
                    jnp.stack([zero, sx, cx], -1)], -2)
    ry = jnp.stack([jnp.stack([cy, zero, sy], -1),
                    jnp.stack([zero, one, zero], -1),
                    jnp.stack([-sy, zero, cy], -1)], -2)
    rz = jnp.stack([jnp.stack([cz, -sz, zero], -1),
                    jnp.stack([sz, cz, zero], -1),
                    jnp.stack([zero, zero, one], -1)], -2)
    return rz @ ry @ rx


class LossVDC3DDFA:
    """JAX/Pallas re-implementation of loss_vdc_3ddfa (computable paths)."""

    def __init__(self, key):
        ks = jax.random.split(key, 6)
        sc = 0.02
        # predicted-face morphable model (bfmf) bases  — deterministic synthetic
        self.mu_f = jax.random.normal(ks[0], (3 * NVER,), jnp.float32)
        self.w_shp_f = sc * jax.random.normal(ks[1], (N_SHP, 3 * NVER), jnp.float32)
        self.w_exp_f = sc * jax.random.normal(ks[2], (N_EXP, 3 * NVER), jnp.float32)
        # ground-truth 3DDFA morphable model (bfma_3ddfa) bases
        self.mu_g = jax.random.normal(ks[3], (3 * NVER,), jnp.float32)
        self.w_shp_g = sc * jax.random.normal(ks[4], (N_SHP, 3 * NVER), jnp.float32)
        self.w_exp_g = sc * jax.random.normal(ks[5], (N_EXP, 3 * NVER), jnp.float32)
        # fused K=128 bases and (1, 3*NVER) means for the single vertex kernel
        self.w_f_cat = jnp.concatenate([self.w_shp_f, self.w_exp_f], axis=0)
        self.w_g_cat = jnp.concatenate([self.w_shp_g, self.w_exp_g], axis=0)
        self.mu_f2 = self.mu_f.reshape(1, 3 * NVER)
        self.mu_g2 = self.mu_g.reshape(1, 3 * NVER)

        self.keypoints = (jnp.arange(68) * NVER) // 68
        # deterministic stand-ins for uv_albedo_map.npy / mask.npy buffers
        ii = jnp.arange(H, dtype=jnp.float32)[:, None, None]
        jj = jnp.arange(W, dtype=jnp.float32)[None, :, None]
        cc = jnp.arange(C, dtype=jnp.float32)[None, None, :]
        self.mean_albedo = 0.5 + 0.001 * (ii + 2.0 * jj + 3.0 * cc)          # (H,W,3)
        self.mask_albedo = jnp.zeros((H, W), jnp.float32).at[4:H - 4, 4:W - 4].set(1.0)
        self.mask_albedo_npixels = self.mask_albedo.sum()
        self.kernel_low = jnp.array([[-1., -1., -1.], [-1., 8., -1.], [-1., -1., -1.]],
                                    jnp.float32)
        self.kernel_high = jnp.array([[1 / 16, 1 / 8, 1 / 16],
                                      [1 / 8, 1 / 4, 1 / 8],
                                      [1 / 16, 1 / 8, 1 / 16]], jnp.float32)

    # ---- morphable models (single fused Pallas matmul for both) ----
    def bfm_forward_both(self, shape_para, exp_para, camera_para,
                         gt_shape, gt_exp, gt_rotate, gt_offset):
        n = shape_para.shape[0]
        alpha_f = jnp.concatenate([shape_para, exp_para], axis=-1)    # (N, 128)
        alpha_g = jnp.concatenate([gt_shape, gt_exp], axis=-1)        # (N, 128)
        v_f, v_g = bfm_vertices_fused(self.mu_f2, self.w_f_cat, alpha_f,
                                      self.mu_g2, self.w_g_cat, alpha_g)
        v_f = v_f.reshape(n, 3, NVER)
        v_g = v_g.reshape(n, 3, NVER)

        scale = camera_para[:, 0:1][:, :, None]
        rot = _euler_to_rot(camera_para[:, 1:4])
        trans = camera_para[:, 4:7][:, :, None]
        face_proj = scale * jnp.einsum('nij,njk->nik', rot, v_f) + trans
        # TODO(synk): the residual-shape branch of bfmf is not modeled; alias it.
        face_proj_res = face_proj

        gt_face_proj = jnp.einsum('nij,njk->nik', gt_rotate, v_g) + gt_offset
        return face_proj, face_proj_res, gt_face_proj

    def get_landmark_68(self, face_proj):
        return jnp.take(face_proj, self.keypoints, axis=2)           # (N, 3, 68)

    # ---- albedo regularizers: fused smooth+sharp Pallas conv hot path ----
    def albedo_conv_losses(self, albedo_a_nhwc, albedo_s_nhwc):
        n, h, w, c = albedo_a_nhwc.shape
        # channel sum in plain JAX (shared 3x3 kernel across channels)
        s_a = jnp.transpose(albedo_a_nhwc.sum(-1), (1, 0, 2)).reshape(h, n * w)
        s_s = jnp.transpose(albedo_s_nhwc.sum(-1), (1, 0, 2)).reshape(h, n * w)
        packed = jnp.concatenate([s_a, s_s], axis=1)                  # (H, 2*N*W)
        mask_packed = jnp.tile(self.mask_albedo, (1, 2 * n))          # (H, 2*N*W)
        kl = self.kernel_low.reshape(9, 1)
        kh = self.kernel_high.reshape(9, 1)
        coef = jnp.concatenate([jnp.broadcast_to(kl, (9, n * w)),
                                jnp.broadcast_to(kh, (9, n * w))], axis=1)

        lane_sums = dual_masked_conv_sq_sum(packed, mask_packed, coef)  # (1, 2*N*W)
        half = n * w
        scale = jnp.float32(c) / self.mask_albedo_npixels / n
        smooth = lane_sums[0, :half].sum() * scale    # kernel_low  on albedo_a
        sharp = lane_sums[0, half:].sum() * scale     # kernel_high on albedo_s
        return smooth, sharp

    # ---- forward ----
    def forward(self, pred_camera_exp, pred_shape, target, albedo=None,
                ori_img=None, conf=None):
        zero = jnp.zeros((1,), jnp.float32)
        metric_keys = ['vdc_landmark', 'vdc_landmark_res', 'shape_smooth_loss',
                       'loss_edge', 'regular_loss_shape', 'regular_loss_exp',
                       'loss_perc_im', 'pixel_loss', 'pixel_loss_all', 'loss_3d',
                       'loss_3d_raw', 'loss_albedo_reg', 'albedo_smooth_loss',
                       'albedo_res_loss', 'loss_fr', 'loss_center',
                       'weighted_center_loss', 'loss_fr_all', 'albedo_sharp_loss',
                       'res_shape_loss']
        metrics = {k: zero for k in metric_keys}
        train_result = {'images_s': None, 'illum_images_s': None,
                        'ver_color_s': None, 'center_norm': zero}

        batch_size = pred_camera_exp.shape[0]
        gt_rotate, gt_offset, gt_shape, gt_exp = _parse_param_batch(target)

        shape_para = pred_shape
        exp_para = pred_camera_exp[:, 7:36]
        camera_para = pred_camera_exp[:, 0:7]
        illum = pred_camera_exp[:, 36:63]       # noqa: F841  (used only by pho_loss)

        face_proj, face_proj_res, gt_face_proj = self.bfm_forward_both(
            shape_para, exp_para, camera_para, gt_shape, gt_exp, gt_rotate, gt_offset)

        pred_landmark = self.get_landmark_68(face_proj)
        g_landmark = self.get_landmark_68(gt_face_proj)

        vdc_landmark = ((g_landmark - pred_landmark) ** 2).reshape(batch_size, -1).mean(1)
        metrics['vdc_landmark'] = vdc_landmark.mean()

        loss = config.mix_loss_weight_3d_vdc_lm * vdc_landmark
        metrics['loss_3d_raw'] = loss
        metrics['loss_3d'] = loss.mean() + metrics['shape_smooth_loss'] * \
            config.weight_shape_smooth_loss

        # TODO(synk): exact BFM statistical regularizers (covariance-weighted) are in
        # external checkpoints; Tikhonov L2 surrogates used instead.
        metrics['regular_loss_shape'] = (shape_para ** 2).mean()
        metrics['regular_loss_exp'] = (exp_para ** 2).mean()

        if not config.weight_pixel_loss == 0:
            albedo_a, albedo_s = albedo                       # NCHW network outputs
            albedo_s_nhwc = jnp.transpose(albedo_s, (0, 2, 3, 1))
            albedo_a_nhwc = jnp.transpose(albedo_a, (0, 2, 3, 1))
            mean_albedo = jnp.broadcast_to(self.mean_albedo, (batch_size, H, W, C))
            train_result['albedo_s'] = mean_albedo + albedo_s_nhwc
            train_result['albedo_a'] = mean_albedo + albedo_a_nhwc
            metrics['loss_albedo_reg'] = (albedo_a_nhwc.mean() ** 2 +
                                          albedo_s_nhwc.mean() ** 2)
            albedo_res_nhwc = albedo_a_nhwc                   # config.use_albedo_res=False
            smooth, sharp = self.albedo_conv_losses(albedo_a_nhwc, albedo_s_nhwc)
            metrics['albedo_smooth_loss'] = smooth
            metrics['albedo_sharp_loss'] = sharp
            train_result['albedo'] = mean_albedo + albedo_res_nhwc
            # TODO(synk): Pixel_loss (differentiable renderer) and PerceptualLoss (VGG)
            # have no in-script equivalent; pixel_loss / loss_perc_im keep zero defaults.

        return metrics, train_result


# ----------------------------- demo -----------------------------
if __name__ == "__main__":
    module = LossVDC3DDFA(jax.random.PRNGKey(42))

    key = jax.random.PRNGKey(0)
    k0, k1, k2, k3, k4 = jax.random.split(key, 5)
    pred_camera_exp = 0.1 * jax.random.normal(k0, (N_BATCH, 63), jnp.float32)
    pred_camera_exp = pred_camera_exp.at[:, 0].set(1.0)          # positive camera scale
    pred_shape = 0.1 * jax.random.normal(k1, (N_BATCH, N_SHP), jnp.float32)
    target = 0.1 * jax.random.normal(k2, (N_BATCH, 62), jnp.float32)
    albedo_a = 0.1 * jax.random.normal(k3, (N_BATCH, C, H, W), jnp.float32)
    albedo_s = 0.1 * jax.random.normal(k4, (N_BATCH, C, H, W), jnp.float32)

    metrics, train_result = module.forward(pred_camera_exp, pred_shape, target,
                                           albedo=(albedo_a, albedo_s))

    for v in metrics.values():
        jax.block_until_ready(v)
    for v in train_result.values():
        if v is not None:
            jax.block_until_ready(v)
    print("KERNEL_OK")
</pallas_src>

<mosaic_0001>
module attributes {stable_mosaic.version = 11 : i64} {
  func.func @_bfm_vertex_kernel(%arg0: memref<1x384xf32, #tpu.memory_space<vmem>>, %arg1: memref<128x384xf32, #tpu.memory_space<vmem>>, %arg2: memref<2x128xf32, #tpu.memory_space<vmem>>, %arg3: memref<1x384xf32, #tpu.memory_space<vmem>>, %arg4: memref<128x384xf32, #tpu.memory_space<vmem>>, %arg5: memref<2x128xf32, #tpu.memory_space<vmem>>, %arg6: memref<2x384xf32, #tpu.memory_space<vmem>>, %arg7: memref<2x384xf32, #tpu.memory_space<vmem>>) attributes {dimension_semantics = [], scalar_prefetch = 0 : i64, scratch_operands = 0 : i64, tpu.core_type = #tpu.core_type<tc>} {
    %c0 = arith.constant 0 : index
    %c0_0 = arith.constant 0 : index
    %0 = vector.load %arg2[%c0, %c0_0] : memref<2x128xf32, #tpu.memory_space<vmem>>, vector<2x128xf32>
    %c0_1 = arith.constant 0 : index
    %c0_2 = arith.constant 0 : index
    %1 = vector.load %arg1[%c0_1, %c0_2] : memref<128x384xf32, #tpu.memory_space<vmem>>, vector<128x384xf32>
    %cst = arith.constant dense<0.000000e+00> : vector<2x384xf32>
    %2 = tpu.matmul %0, %1, %cst {dimension_numbers = #tpu.dot_dimension_numbers<[1], [0], [0], [1], [0, 0, 1, 1], [], []>} : vector<2x128xf32>, vector<128x384xf32>, vector<2x384xf32> -> vector<2x384xf32>
    %c0_3 = arith.constant 0 : index
    %c0_4 = arith.constant 0 : index
    %3 = vector.load %arg0[%c0_3, %c0_4] : memref<1x384xf32, #tpu.memory_space<vmem>>, vector<1x384xf32>
    %4 = vector.broadcast %3 : vector<1x384xf32> to vector<2x384xf32>
    %5 = arith.addf %2, %4 : vector<2x384xf32>
    %c0_5 = arith.constant 0 : index
    %c0_6 = arith.constant 0 : index
    %6 = vector.load %arg6[%c0_5, %c0_6] : memref<2x384xf32, #tpu.memory_space<vmem>>, vector<2x384xf32>
    tpu.vector_store %arg6[%c0_5, %c0_6], %5 {strides = array<i32>} : memref<2x384xf32, #tpu.memory_space<vmem>>, vector<2x384xf32>,
    %c0_7 = arith.constant 0 : index
    %c0_8 = arith.constant 0 : index
    %7 = vector.load %arg5[%c0_7, %c0_8] : memref<2x128xf32, #tpu.memory_space<vmem>>, vector<2x128xf32>
    %c0_9 = arith.constant 0 : index
    %c0_10 = arith.constant 0 : index
    %8 = vector.load %arg4[%c0_9, %c0_10] : memref<128x384xf32, #tpu.memory_space<vmem>>, vector<128x384xf32>
    %cst_11 = arith.constant dense<0.000000e+00> : vector<2x384xf32>
    %9 = tpu.matmul %7, %8, %cst_11 {dimension_numbers = #tpu.dot_dimension_numbers<[1], [0], [0], [1], [0, 0, 1, 1], [], []>} : vector<2x128xf32>, vector<128x384xf32>, vector<2x384xf32> -> vector<2x384xf32>
    %c0_12 = arith.constant 0 : index
    %c0_13 = arith.constant 0 : index
    %10 = vector.load %arg3[%c0_12, %c0_13] : memref<1x384xf32, #tpu.memory_space<vmem>>, vector<1x384xf32>
    %11 = vector.broadcast %10 : vector<1x384xf32> to vector<2x384xf32>
    %12 = arith.addf %9, %11 : vector<2x384xf32>
    %c0_14 = arith.constant 0 : index
    %c0_15 = arith.constant 0 : index
    %13 = vector.load %arg7[%c0_14, %c0_15] : memref<2x384xf32, #tpu.memory_space<vmem>>, vector<2x384xf32>
    tpu.vector_store %arg7[%c0_14, %c0_15], %12 {strides = array<i32>} : memref<2x384xf32, #tpu.memory_space<vmem>>, vector<2x384xf32>,
    return
  }
}

</mosaic_0001>

<llo_original>
// kernel: tpu_custom_call.1
$region0: #{tpu_custom_call.1}
  #allocation0 [shape = 'u32[]', space=smem, size = 0x4, offset = 0x4, fixed_abs, tag = 'smem constant byte address 0x4 - core index']
  #allocation1 [shape = 'u32[144,128]{1,0:T(1,128)}', space=vmem, size = 0x12000, scoped, tag = 'internal scratch']
  %s0 = inlined_call_operand.hbm [shape: f32[1,384], index: 0, kind: input, shape index: {}]
  %s1 = inlined_call_operand.hbm [shape: f32[128,384], index: 1, kind: input, shape index: {}]
  %s2 = inlined_call_operand.vmem [shape: f32[2,128], index: 2, kind: input, shape index: {}]
  %s3 = inlined_call_operand.vmem [shape: f32[1,384], index: 3, kind: input, shape index: {}]
  %s4 = inlined_call_operand.hbm [shape: f32[128,384], index: 4, kind: input, shape index: {}]
  %s5 = inlined_call_operand.vmem [shape: f32[2,128], index: 5, kind: input, shape index: {}]
  %s6 = inlined_call_operand.hbm [shape: f32[2,384], index: 6, kind: output, shape index: {0}]
  %s7 = inlined_call_operand.hbm [shape: f32[2,384], index: 7, kind: output, shape index: {1}]
  %8 = xla_tuple %s6, %s7
  %s9 = sld [smem:[#allocation0]]
  $region54: #{tpu_custom_call.1} parent=0
    _
  %s11 = ssub.s32 1, %s9
  %s12 = scalar_select 0, %s11, %s9
  $region1: #{tpu_custom_call.1} parent=0
    #allocation2 [shape = 'u8[1536]{0}', space=vmem, size = 0x800, scoped, tag = 'input window, operand 0, single buffered']
    #allocation3 [shape = 's32[1]{0}', space=sflag, size = 0x4, scoped, tag = 'scoped memory for tpu_custom_call.1']
    #allocation4 [shape = 's32[1]{0}', space=sflag, size = 0x4, scoped, tag = 'scoped memory for tpu_custom_call.1']
    #allocation5 [shape = 'u8[196608]{0}', space=vmem, size = 0x30000, scoped, tag = 'input window, operand 1, single buffered']
    #allocation6 [shape = 's32[1]{0}', space=sflag, size = 0x4, scoped, tag = 'scoped memory for tpu_custom_call.1']
    #allocation7 [shape = 'u8[196608]{0}', space=vmem, size = 0x30000, scoped, tag = 'input window, operand 4, single buffered']
    #allocation8 [shape = 'u8[3072]{0}', space=vmem, size = 0xc00, scoped, tag = 'output window, operand 0, single buffered']
    #allocation9 [shape = 'u8[3072]{0}', space=vmem, size = 0xc00, scoped, tag = 'output window, operand 1, single buffered']
    #allocation10 [shape = 's32[1]{0}', space=sflag, size = 0x4, scoped, tag = 'scoped memory for tpu_custom_call.1']
    %13 = vsyncpa [#allocation3], 0
    %14 = vsyncpa [#allocation6], 0
    %15 = vsyncpa [#allocation4], 0
    %16 = vsyncpa [#allocation10], 0
    // Predicated region
    $region2: #{tpu_custom_call.1} parent=1 // pred_check
      _
    $region3: #{tpu_custom_call.1} parent=1 // pred_check_branch
      %18 = sbr.rel (0) target = $region5
    $region4: #{tpu_custom_call.1} parent=1 // pred_region
      %s20 = ssub.s32 48, 48
      %21 = vsyncadd [#allocation3], %s20
      %s23 = sshll.u32 [#allocation2], 4
      %s24 = int_to_ptr.vmem [resolvable:$true] %s23
      %26 = dma.hbm_to_vmem [thread:$0]  %s0, 48, %s24, [#allocation3]
    $region5: #{tpu_custom_call.1} parent=1 // pred_fallthru
      _
    // Predicated region
    $region6: #{tpu_custom_call.1} parent=1 // pred_check
      _
    $region7: #{tpu_custom_call.1} parent=1 // pred_check_branch
      %28 = sbr.rel (0) target = $region9
    $region8: #{tpu_custom_call.1} parent=1 // pred_region
      %s30 = ssub.s32 6144, 6144
      %31 = vsyncadd [#allocation6], %s30
      %s32 = sshll.u32 [#allocation5], 4
      %s33 = int_to_ptr.vmem [resolvable:$true] %s32
      %38 = dma.hbm_to_vmem [thread:$0]  %s1, 6144, %s33, [#allocation6], 384, 384, 24
    $region9: #{tpu_custom_call.1} parent=1 // pred_fallthru
      _
    // Predicated region
    $region10: #{tpu_custom_call.1} parent=1 // pred_check
      _
    $region11: #{tpu_custom_call.1} parent=1 // pred_check_branch
      %40 = sbr.rel (0) target = $region13
    $region12: #{tpu_custom_call.1} parent=1 // pred_region
      _
    $region13: #{tpu_custom_call.1} parent=1 // pred_fallthru
      _
    // Predicated region
    $region14: #{tpu_custom_call.1} parent=1 // pred_check
      _
    $region15: #{tpu_custom_call.1} parent=1 // pred_check_branch
      %42 = sbr.rel (0) target = $region17
    $region16: #{tpu_custom_call.1} parent=1 // pred_region
      _
    $region17: #{tpu_custom_call.1} parent=1 // pred_fallthru
      _
    // Predicated region
    $region18: #{tpu_custom_call.1} parent=1 // pred_check
      _
    $region19: #{tpu_custom_call.1} parent=1 // pred_check_branch
      %44 = sbr.rel (0) target = $region21
    $region20: #{tpu_custom_call.1} parent=1 // pred_region
      %s46 = ssub.s32 6144, 6144
      %47 = vsyncadd [#allocation6], %s46
      %s48 = sshll.u32 [#allocation7], 4
      %s49 = int_to_ptr.vmem [resolvable:$true] %s48
      %54 = dma.hbm_to_vmem [thread:$0]  %s4, 6144, %s49, [#allocation6], 384, 384, 24
    $region21: #{tpu_custom_call.1} parent=1 // pred_fallthru
      _
    // Predicated region
    $region22: #{tpu_custom_call.1} parent=1 // pred_check
      _
    $region23: #{tpu_custom_call.1} parent=1 // pred_check_branch
      %56 = sbr.rel (0) target = $region25
    $region24: #{tpu_custom_call.1} parent=1 // pred_region
      _
    $region25: #{tpu_custom_call.1} parent=1 // pred_fallthru
      _
    // Predicated region
    $region26: #{tpu_custom_call.1} parent=1 // pred_check
      _
    $region27: #{tpu_custom_call.1} parent=1 // pred_check_branch
      %58 = sbr.rel (0) target = $region29
    $region28: #{tpu_custom_call.1} parent=1 // pred_region
      %59 = dma.done [#allocation3], 48
    $region29: #{tpu_custom_call.1} parent=1 // pred_fallthru
      _
    // Predicated region
    $region30: #{tpu_custom_call.1} parent=1 // pred_check
      _
    $region31: #{tpu_custom_call.1} parent=1 // pred_check_branch
      %61 = sbr.rel (0) target = $region33
    $region32: #{tpu_custom_call.1} parent=1 // pred_region
      %62 = dma.done [#allocation6], 6144
    $region33: #{tpu_custom_call.1} parent=1 // pred_fallthru
      _
    // Predicated region
    $region34: #{tpu_custom_call.1} parent=1 // pred_check
      _
    $region35: #{tpu_custom_call.1} parent=1 // pred_check_branch
      %64 = sbr.rel (0) target = $region37
    $region36: #{tpu_custom_call.1} parent=1 // pred_region
      %65 = dma.done [#allocation6], 6144
    $region37: #{tpu_custom_call.1} parent=1 // pred_fallthru
      _
    %v66 = vld [vmem:[%s2] sm:$0x3]
    %v67 = vld [vmem:[#allocation5] sm:$0xff]
    %v68 = vld [vmem:[#allocation5 + $0x8] sm:$0xff]
    %v69 = vld [vmem:[#allocation5 + $0x10] sm:$0xff]
    %v70 = vld [vmem:[#allocation5 + $0x18] sm:$0xff]
    %v71 = vld [vmem:[#allocation5 + $0x20] sm:$0xff]
    %v72 = vld [vmem:[#allocation5 + $0x28] sm:$0xff]
    %v73 = vld [vmem:[#allocation5 + $0x30] sm:$0xff]
    %v74 = vld [vmem:[#allocation5 + $0x38] sm:$0xff]
    %v75 = vld [vmem:[#allocation5 + $0x40] sm:$0xff]
    %v76 = vld [vmem:[#allocation5 + $0x48] sm:$0xff]
    %v77 = vld [vmem:[#allocation5 + $0x50] sm:$0xff]
    %v78 = vld [vmem:[#allocation5 + $0x58] sm:$0xff]
    %v79 = vld [vmem:[#allocation5 + $0x60] sm:$0xff]
    %v80 = vld [vmem:[#allocation5 + $0x68] sm:$0xff]
    %v81 = vld [vmem:[#allocation5 + $0x70] sm:$0xff]
    %v82 = vld [vmem:[#allocation5 + $0x78] sm:$0xff]
    %v83 = vld [vmem:[#allocation5 + $0x80] sm:$0xff]
    %v84 = vld [vmem:[#allocation5 + $0x88] sm:$0xff]
    %v85 = vld [vmem:[#allocation5 + $0x90] sm:$0xff]
    %v86 = vld [vmem:[#allocation5 + $0x98] sm:$0xff]
    %v87 = vld [vmem:[#allocation5 + $0xa0] sm:$0xff]
    %v88 = vld [vmem:[#allocation5 + $0xa8] sm:$0xff]
    %v89 = vld [vmem:[#allocation5 + $0xb0] sm:$0xff]
    %v90 = vld [vmem:[#allocation5 + $0xb8] sm:$0xff]
    %v91 = vld [vmem:[#allocation5 + $0xc0] sm:$0xff]
    %v92 = vld [vmem:[#allocation5 + $0xc8] sm:$0xff]
    %v93 = vld [vmem:[#allocation5 + $0xd0] sm:$0xff]
    %v94 = vld [vmem:[#allocation5 + $0xd8] sm:$0xff]
    %v95 = vld [vmem:[#allocation5 + $0xe0] sm:$0xff]
    %v96 = vld [vmem:[#allocation5 + $0xe8] sm:$0xff]
    %v97 = vld [vmem:[#allocation5 + $0xf0] sm:$0xff]
    %v98 = vld [vmem:[#allocation5 + $0xf8] sm:$0xff]
    %v99 = vld [vmem:[#allocation5 + $0x100] sm:$0xff]
    %v100 = vld [vmem:[#allocation5 + $0x108] sm:$0xff]
    %v101 = vld [vmem:[#allocation5 + $0x110] sm:$0xff]
    %v102 = vld [vmem:[#allocation5 + $0x118] sm:$0xff]
    %v103 = vld [vmem:[#allocation5 + $0x120] sm:$0xff]
    %v104 = vld [vmem:[#allocation5 + $0x128] sm:$0xff]
    %v105 = vld [vmem:[#allocation5 + $0x130] sm:$0xff]
    %v106 = vld [vmem:[#allocation5 + $0x138] sm:$0xff]
    %v107 = vld [vmem:[#allocation5 + $0x140] sm:$0xff]
    %v108 = vld [vmem:[#allocation5 + $0x148] sm:$0xff]
    %v109 = vld [vmem:[#allocation5 + $0x150] sm:$0xff]
    %v110 = vld [vmem:[#allocation5 + $0x158] sm:$0xff]
    %v111 = vld [vmem:[#allocation5 + $0x160] sm:$0xff]
    %v112 = vld [vmem:[#allocation5 + $0x168] sm:$0xff]
    %v113 = vld [vmem:[#allocation5 + $0x170] sm:$0xff]
    %v114 = vld [vmem:[#allocation5 + $0x178] sm:$0xff]
    %v115 = vld [vmem:[#allocation2] sm:$0x7]
    %v117 = vlaneseq
    %v118 = vshrl.u32 %v117, 7
    %v119 = vsub.s32 0, %v118
    %v120 = vrot.slane %v115, %v119
    %v121 = vlaneseq
    %v122 = vshrl.u32 %v121, 7
    %v123 = vsub.s32 1, %v122
    %v124 = vrot.slane %v115, %v123
    %v125 = vlaneseq
    %v126 = vshrl.u32 %v125, 7
    %v127 = vsub.s32 2, %v126
    %v128 = vrot.slane %v115, %v127
    %132 = vmatprep.subr.mxu0 %v113
    %133 = vmatpush1.msra.mxu0 %v112
    %134 = vmatprep.subr.mxu0 %v110
    %135 = vmatpush1.msra.mxu0 %v109
    %136 = vmatprep.subr.mxu0 %v107
    %137 = vmatpush1.msra.mxu0 %v106
    %138 = vmatprep.subr.mxu0 %v104
    %139 = vmatpush1.msra.mxu0 %v103
    %140 = vmatprep.subr.mxu0 %v101
    %141 = vmatpush1.msra.mxu0 %v100
    %142 = vmatprep.subr.mxu0 %v98
    %143 = vmatpush1.msra.mxu0 %v97
    %144 = vmatprep.subr.mxu0 %v95
    %145 = vmatpush1.msra.mxu0 %v94
    %146 = vmatprep.subr.mxu0 %v92
    %147 = vmatpush1.msra.mxu0 %v91
    %148 = vmatprep.subr.mxu0 %v89
    %149 = vmatpush1.msra.mxu0 %v88
    %150 = vmatprep.subr.mxu0 %v86
    %151 = vmatpush1.msra.mxu0 %v85
    %152 = vmatprep.subr.mxu0 %v83
    %153 = vmatpush1.msra.mxu0 %v82
    %154 = vmatprep.subr.mxu0 %v80
    %155 = vmatpush1.msra.mxu0 %v79
    %156 = vmatprep.subr.mxu0 %v77
    %157 = vmatpush1.msra.mxu0 %v76
    %158 = vmatprep.subr.mxu0 %v74
    %159 = vmatpush1.msra.mxu0 %v73
    %160 = vmatprep.subr.mxu0 %v71
    %161 = vmatpush1.msra.mxu0 %v70
    %162 = vmatprep.subr.mxu0 %v68
    %163 = vmatpush1.msra.mxu0 %v67
    %164 = vmatprep.subr.mxu0 0.0
    %165 = vmatpush2.msra.mxu0 0.0
    %166 = vmatprep.subr.mxu0 0.0
    %167 = vmatpush2.msra.mxu0 0.0
    %168 = vmatprep.subr.mxu0 0.0
    %169 = vmatpush2.msra.mxu0 0.0
    %170 = vmatprep.subr.mxu0 0.0
    %171 = vmatpush2.msra.mxu0 0.0
    %172 = vmatprep.subr.mxu0 0.0
    %173 = vmatpush2.msra.mxu0 0.0
    %174 = vmatprep.subr.mxu0 0.0
    %175 = vmatpush2.msra.mxu0 0.0
    %176 = vmatprep.subr.mxu0 0.0
    %177 = vmatpush2.msra.mxu0 0.0
    %178 = vmatprep.subr.mxu0 0.0
    %179 = vmatpush2.msra.mxu0 0.0
    %180 = vmatprep.subr.mxu0 0.0
    %181 = vmatpush2.msra.mxu0 0.0
    %182 = vmatprep.subr.mxu0 0.0
    %183 = vmatpush2.msra.mxu0 0.0
    %184 = vmatprep.subr.mxu0 0.0
    %185 = vmatpush2.msra.mxu0 0.0
    %186 = vmatprep.subr.mxu0 0.0
    %187 = vmatpush2.msra.mxu0 0.0
    %188 = vmatprep.subr.mxu0 0.0
    %189 = vmatpush2.msra.mxu0 0.0
    %190 = vmatprep.subr.mxu0 0.0
    %191 = vmatpush2.msra.mxu0 0.0
    %192 = vmatprep.subr.mxu0 0.0
    %193 = vmatpush2.msra.mxu0 0.0
    %194 = vmatprep.subr.mxu0 0.0
    %195 = vmatpush2.msra.mxu0 0.0
    %196 = vmatprep.mubr.f32.mxu0 0.0
    %197 = vmatmul.mubr.f32.gmra.mxu0 %v66
    %v198 = vpop.f32.mrf.mxu0
    %v199 = vadd.f32 %v120, %v198
    %v200 = vpop.f32.mrf.mxu0
    %v201 = vadd.f32 %v124, %v200
    %202 = vdwg.mxu0
    %203 = vmatprep.subr.mxu0 0.0
    %204 = vmatpush1.msra.mxu0 %v114
    %205 = vmatprep.subr.mxu0 0.0
    %206 = vmatpush1.msra.mxu0 %v111
    %207 = vmatprep.subr.mxu0 0.0
    %208 = vmatpush1.msra.mxu0 %v108
    %209 = vmatprep.subr.mxu0 0.0
    %210 = vmatpush1.msra.mxu0 %v105
    %211 = vmatprep.subr.mxu0 0.0
    %212 = vmatpush1.msra.mxu0 %v102
    %213 = vmatprep.subr.mxu0 0.0
    %214 = vmatpush1.msra.mxu0 %v99
    %215 = vmatprep.subr.mxu0 0.0
    %216 = vmatpush1.msra.mxu0 %v96
    %217 = vmatprep.subr.mxu0 0.0
    %218 = vmatpush1.msra.mxu0 %v93
    %219 = vmatprep.subr.mxu0 0.0
    %220 = vmatpush1.msra.mxu0 %v90
    %221 = vmatprep.subr.mxu0 0.0
    %222 = vmatpush1.msra.mxu0 %v87
    %223 = vmatprep.subr.mxu0 0.0
    %224 = vmatpush1.msra.mxu0 %v84
    %225 = vmatprep.subr.mxu0 0.0
    %226 = vmatpush1.msra.mxu0 %v81
    %227 = vmatprep.subr.mxu0 0.0
    %228 = vmatpush1.msra.mxu0 %v78
    %229 = vmatprep.subr.mxu0 0.0
    %230 = vmatpush1.msra.mxu0 %v75
    %231 = vmatprep.subr.mxu0 0.0
    %232 = vmatpush1.msra.mxu0 %v72
    %233 = vmatprep.subr.mxu0 0.0
    %234 = vmatpush1.msra.mxu0 %v69
    %235 = vmatprep.subr.mxu0 0.0
    %236 = vmatpush2.msra.mxu0 0.0
    %237 = vmatprep.subr.mxu0 0.0
    %238 = vmatpush2.msra.mxu0 0.0
    %239 = vmatprep.subr.mxu0 0.0
    %240 = vmatpush2.msra.mxu0 0.0
    %241 = vmatprep.subr.mxu0 0.0
    %242 = vmatpush2.msra.mxu0 0.0
    %243 = vmatprep.subr.mxu0 0.0
    %244 = vmatpush2.msra.mxu0 0.0
    %245 = vmatprep.subr.mxu0 0.0
    %246 = vmatpush2.msra.mxu0 0.0
    %247 = vmatprep.subr.mxu0 0.0
    %248 = vmatpush2.msra.mxu0 0.0
    %249 = vmatprep.subr.mxu0 0.0
    %250 = vmatpush2.msra.mxu0 0.0
    %251 = vmatprep.subr.mxu0 0.0
    %252 = vmatpush2.msra.mxu0 0.0
    %253 = vmatprep.subr.mxu0 0.0
    %254 = vmatpush2.msra.mxu0 0.0
    %255 = vmatprep.subr.mxu0 0.0
    %256 = vmatpush2.msra.mxu0 0.0
    %257 = vmatprep.subr.mxu0 0.0
    %258 = vmatpush2.msra.mxu0 0.0
    %259 = vmatprep.subr.mxu0 0.0
    %260 = vmatpush2.msra.mxu0 0.0
    %261 = vmatprep.subr.mxu0 0.0
    %262 = vmatpush2.msra.mxu0 0.0
    %263 = vmatprep.subr.mxu0 0.0
    %264 = vmatpush2.msra.mxu0 0.0
    %265 = vmatprep.subr.mxu0 0.0
    %266 = vmatpush2.msra.mxu0 0.0
    %267 = vmatprep.mubr.f32.mxu0 0.0
    %268 = vmatmul.mubr.f32.gmra.mxu0 %v66
    %v269 = vpop.f32.mrf.mxu0
    %v270 = vadd.f32 %v128, %v269
    %v271 = vpop.f32.mrf.mxu0
    %272 = vdwg.mxu0
    %v276 = vcombine.low %v199, %v201
    %v278 = vunpack.c.l.s4 1983009808
    %v279 = vunpack.c.0.s8 %v278
    %v280 = vlaneseq
    %v281 = vshrl.u32 %v280, 7
    %v282 = vsub.s32 %v279, %v281
    %v283 = vrot.slane %v276, %v282
    %v285 = vunpack.c.l.s4 1983009808
    %v286 = vunpack.c.0.s8 %v285
    %v287 = vlaneseq
    %v288 = vshrl.u32 %v287, 7
    %v289 = vsub.s32 %v286, %v288
    %v290 = vrot.slane %v270, %v289
    %v291 = vcombine.low %v283, %v290
    %293 = vst [vmem:[#allocation8] sm:$0x3f] %v291
    %v294 = vld [vmem:[%s5] sm:$0x3]
    %v295 = vld [vmem:[#allocation7] sm:$0xff]
    %v296 = vld [vmem:[#allocation7 + $0x8] sm:$0xff]
    %v297 = vld [vmem:[#allocation7 + $0x10] sm:$0xff]
    %v298 = vld [vmem:[#allocation7 + $0x18] sm:$0xff]
    %v299 = vld [vmem:[#allocation7 + $0x20] sm:$0xff]
    %v300 = vld [vmem:[#allocation7 + $0x28] sm:$0xff]
    %v301 = vld [vmem:[#allocation7 + $0x30] sm:$0xff]
    %v302 = vld [vmem:[#allocation7 + $0x38] sm:$0xff]
    %v303 = vld [vmem:[#allocation7 + $0x40] sm:$0xff]
    %v304 = vld [vmem:[#allocation7 + $0x48] sm:$0xff]
    %v305 = vld [vmem:[#allocation7 + $0x50] sm:$0xff]
    %v306 = vld [vmem:[#allocation7 + $0x58] sm:$0xff]
    %v307 = vld [vmem:[#allocation7 + $0x60] sm:$0xff]
    %v308 = vld [vmem:[#allocation7 + $0x68] sm:$0xff]
    %v309 = vld [vmem:[#allocation7 + $0x70] sm:$0xff]
    %v310 = vld [vmem:[#allocation7 + $0x78] sm:$0xff]
    %v311 = vld [vmem:[#allocation7 + $0x80] sm:$0xff]
    %v312 = vld [vmem:[#allocation7 + $0x88] sm:$0xff]
    %v313 = vld [vmem:[#allocation7 + $0x90] sm:$0xff]
    %v314 = vld [vmem:[#allocation7 + $0x98] sm:$0xff]
    %v315 = vld [vmem:[#allocation7 + $0xa0] sm:$0xff]
    %v316 = vld [vmem:[#allocation7 + $0xa8] sm:$0xff]
    %v317 = vld [vmem:[#allocation7 + $0xb0] sm:$0xff]
    %v318 = vld [vmem:[#allocation7 + $0xb8] sm:$0xff]
    %v319 = vld [vmem:[#allocation7 + $0xc0] sm:$0xff]
    %v320 = vld [vmem:[#allocation7 + $0xc8] sm:$0xff]
    %v321 = vld [vmem:[#allocation7 + $0xd0] sm:$0xff]
    %v322 = vld [vmem:[#allocation7 + $0xd8] sm:$0xff]
    %v323 = vld [vmem:[#allocation7 + $0xe0] sm:$0xff]
    %v324 = vld [vmem:[#allocation7 + $0xe8] sm:$0xff]
    %v325 = vld [vmem:[#allocation7 + $0xf0] sm:$0xff]
    %v326 = vld [vmem:[#allocation7 + $0xf8] sm:$0xff]
    %v327 = vld [vmem:[#allocation7 + $0x100] sm:$0xff]
    %v328 = vld [vmem:[#allocation7 + $0x108] sm:$0xff]
    %v329 = vld [vmem:[#allocation7 + $0x110] sm:$0xff]
    %v330 = vld [vmem:[#allocation7 + $0x118] sm:$0xff]
    %v331 = vld [vmem:[#allocation7 + $0x120] sm:$0xff]
    %v332 = vld [vmem:[#allocation7 + $0x128] sm:$0xff]
    %v333 = vld [vmem:[#allocation7 + $0x130] sm:$0xff]
    %v334 = vld [vmem:[#allocation7 + $0x138] sm:$0xff]
    %v335 = vld [vmem:[#allocation7 + $0x140] sm:$0xff]
    %v336 = vld [vmem:[#allocation7 + $0x148] sm:$0xff]
    %v337 = vld [vmem:[#allocation7 + $0x150] sm:$0xff]
    %v338 = vld [vmem:[#allocation7 + $0x158] sm:$0xff]
    %v339 = vld [vmem:[#allocation7 + $0x160] sm:$0xff]
    %v340 = vld [vmem:[#allocation7 + $0x168] sm:$0xff]
    %v341 = vld [vmem:[#allocation7 + $0x170] sm:$0xff]
    %v342 = vld [vmem:[#allocation7 + $0x178] sm:$0xff]
    %v343 = vld [vmem:[%s3] sm:$0x7]
    %v345 = vlaneseq
    %v346 = vshrl.u32 %v345, 7
    %v347 = vsub.s32 0, %v346
    %v348 = vrot.slane %v343, %v347
    %v349 = vlaneseq
    %v350 = vshrl.u32 %v349, 7
    %v351 = vsub.s32 1, %v350
    %v352 = vrot.slane %v343, %v351
    %v353 = vlaneseq
    %v354 = vshrl.u32 %v353, 7
    %v355 = vsub.s32 2, %v354
    %v356 = vrot.slane %v343, %v355
    %360 = vmatprep.subr.mxu0 %v341
    %361 = vmatpush1.msra.mxu0 %v340
    %362 = vmatprep.subr.mxu0 %v338
    %363 = vmatpush1.msra.mxu0 %v337
    %364 = vmatprep.subr.mxu0 %v335
    %365 = vmatpush1.msra.mxu0 %v334
    %366 = vmatprep.subr.mxu0 %v332
    %367 = vmatpush1.msra.mxu0 %v331
    %368 = vmatprep.subr.mxu0 %v329
    %369 = vmatpush1.msra.mxu0 %v328
    %370 = vmatprep.subr.mxu0 %v326
    %371 = vmatpush1.msra.mxu0 %v325
    %372 = vmatprep.subr.mxu0 %v323
    %373 = vmatpush1.msra.mxu0 %v322
    %374 = vmatprep.subr.mxu0 %v320
    %375 = vmatpush1.msra.mxu0 %v319
    %376 = vmatprep.subr.mxu0 %v317
    %377 = vmatpush1.msra.mxu0 %v316
    %378 = vmatprep.subr.mxu0 %v314
    %379 = vmatpush1.msra.mxu0 %v313
    %380 = vmatprep.subr.mxu0 %v311
    %381 = vmatpush1.msra.mxu0 %v310
    %382 = vmatprep.subr.mxu0 %v308
    %383 = vmatpush1.msra.mxu0 %v307
    %384 = vmatprep.subr.mxu0 %v305
    %385 = vmatpush1.msra.mxu0 %v304
    %386 = vmatprep.subr.mxu0 %v302
    %387 = vmatpush1.msra.mxu0 %v301
    %388 = vmatprep.subr.mxu0 %v299
    %389 = vmatpush1.msra.mxu0 %v298
    %390 = vmatprep.subr.mxu0 %v296
    %391 = vmatpush1.msra.mxu0 %v295
    %392 = vmatprep.subr.mxu0 0.0
    %393 = vmatpush2.msra.mxu0 0.0
    %394 = vmatprep.subr.mxu0 0.0
    %395 = vmatpush2.msra.mxu0 0.0
    %396 = vmatprep.subr.mxu0 0.0
    %397 = vmatpush2.msra.mxu0 0.0
    %398 = vmatprep.subr.mxu0 0.0
    %399 = vmatpush2.msra.mxu0 0.0
    %400 = vmatprep.subr.mxu0 0.0
    %401 = vmatpush2.msra.mxu0 0.0
    %402 = vmatprep.subr.mxu0 0.0
    %403 = vmatpush2.msra.mxu0 0.0
    %404 = vmatprep.subr.mxu0 0.0
    %405 = vmatpush2.msra.mxu0 0.0
    %406 = vmatprep.subr.mxu0 0.0
    %407 = vmatpush2.msra.mxu0 0.0
    %408 = vmatprep.subr.mxu0 0.0
    %409 = vmatpush2.msra.mxu0 0.0
    %410 = vmatprep.subr.mxu0 0.0
    %411 = vmatpush2.msra.mxu0 0.0
    %412 = vmatprep.subr.mxu0 0.0
    %413 = vmatpush2.msra.mxu0 0.0
    %414 = vmatprep.subr.mxu0 0.0
    %415 = vmatpush2.msra.mxu0 0.0
    %416 = vmatprep.subr.mxu0 0.0
    %417 = vmatpush2.msra.mxu0 0.0
    %418 = vmatprep.subr.mxu0 0.0
    %419 = vmatpush2.msra.mxu0 0.0
    %420 = vmatprep.subr.mxu0 0.0
    %421 = vmatpush2.msra.mxu0 0.0
    %422 = vmatprep.subr.mxu0 0.0
    %423 = vmatpush2.msra.mxu0 0.0
    %424 = vmatprep.mubr.f32.mxu0 0.0
    %425 = vmatmul.mubr.f32.gmra.mxu0 %v294
    %v426 = vpop.f32.mrf.mxu0
    %v427 = vadd.f32 %v348, %v426
    %v428 = vpop.f32.mrf.mxu0
    %v429 = vadd.f32 %v352, %v428
    %430 = vdwg.mxu0
    %431 = vmatprep.subr.mxu0 0.0
    %432 = vmatpush1.msra.mxu0 %v342
    %433 = vmatprep.subr.mxu0 0.0
    %434 = vmatpush1.msra.mxu0 %v339
    %435 = vmatprep.subr.mxu0 0.0
    %436 = vmatpush1.msra.mxu0 %v336
    %437 = vmatprep.subr.mxu0 0.0
    %438 = vmatpush1.msra.mxu0 %v333
    %439 = vmatprep.subr.mxu0 0.0
    %440 = vmatpush1.msra.mxu0 %v330
    %441 = vmatprep.subr.mxu0 0.0
    %442 = vmatpush1.msra.mxu0 %v327
    %443 = vmatprep.subr.mxu0 0.0
    %444 = vmatpush1.msra.mxu0 %v324
    %445 = vmatprep.subr.mxu0 0.0
    %446 = vmatpush1.msra.mxu0 %v321
    %447 = vmatprep.subr.mxu0 0.0
    %448 = vmatpush1.msra.mxu0 %v318
    %449 = vmatprep.subr.mxu0 0.0
    %450 = vmatpush1.msra.mxu0 %v315
    %451 = vmatprep.subr.mxu0 0.0
    %452 = vmatpush1.msra.mxu0 %v312
    %453 = vmatprep.subr.mxu0 0.0
    %454 = vmatpush1.msra.mxu0 %v309
    %455 = vmatprep.subr.mxu0 0.0
    %456 = vmatpush1.msra.mxu0 %v306
    %457 = vmatprep.subr.mxu0 0.0
    %458 = vmatpush1.msra.mxu0 %v303
    %459 = vmatprep.subr.mxu0 0.0
    %460 = vmatpush1.msra.mxu0 %v300
    %461 = vmatprep.subr.mxu0 0.0
    %462 = vmatpush1.msra.mxu0 %v297
    %463 = vmatprep.subr.mxu0 0.0
    %464 = vmatpush2.msra.mxu0 0.0
    %465 = vmatprep.subr.mxu0 0.0
    %466 = vmatpush2.msra.mxu0 0.0
    %467 = vmatprep.subr.mxu0 0.0
    %468 = vmatpush2.msra.mxu0 0.0
    %469 = vmatprep.subr.mxu0 0.0
    %470 = vmatpush2.msra.mxu0 0.0
    %471 = vmatprep.subr.mxu0 0.0
    %472 = vmatpush2.msra.mxu0 0.0
    %473 = vmatprep.subr.mxu0 0.0
    %474 = vmatpush2.msra.mxu0 0.0
    %475 = vmatprep.subr.mxu0 0.0
    %476 = vmatpush2.msra.mxu0 0.0
    %477 = vmatprep.subr.mxu0 0.0
    %478 = vmatpush2.msra.mxu0 0.0
    %479 = vmatprep.subr.mxu0 0.0
    %480 = vmatpush2.msra.mxu0 0.0
    %481 = vmatprep.subr.mxu0 0.0
    %482 = vmatpush2.msra.mxu0 0.0
    %483 = vmatprep.subr.mxu0 0.0
    %484 = vmatpush2.msra.mxu0 0.0
    %485 = vmatprep.subr.mxu0 0.0
    %486 = vmatpush2.msra.mxu0 0.0
    %487 = vmatprep.subr.mxu0 0.0
    %488 = vmatpush2.msra.mxu0 0.0
    %489 = vmatprep.subr.mxu0 0.0
    %490 = vmatpush2.msra.mxu0 0.0
    %491 = vmatprep.subr.mxu0 0.0
    %492 = vmatpush2.msra.mxu0 0.0
    %493 = vmatprep.subr.mxu0 0.0
    %494 = vmatpush2.msra.mxu0 0.0
    %495 = vmatprep.mubr.f32.mxu0 0.0
    %496 = vmatmul.mubr.f32.gmra.mxu0 %v294
    %v497 = vpop.f32.mrf.mxu0
    %v498 = vadd.f32 %v356, %v497
    %v499 = vpop.f32.mrf.mxu0
    %500 = vdwg.mxu0
    %v504 = vcombine.low %v427, %v429
    %v506 = vunpack.c.l.s4 1983009808
    %v507 = vunpack.c.0.s8 %v506
    %v508 = vlaneseq
    %v509 = vshrl.u32 %v508, 7
    %v510 = vsub.s32 %v507, %v509
    %v511 = vrot.slane %v504, %v510
    %v513 = vunpack.c.l.s4 1983009808
    %v514 = vunpack.c.0.s8 %v513
    %v515 = vlaneseq
    %v516 = vshrl.u32 %v515, 7
    %v517 = vsub.s32 %v514, %v516
    %v518 = vrot.slane %v498, %v517
    %v519 = vcombine.low %v511, %v518
    %521 = vst [vmem:[#allocation9] sm:$0x3f] %v519
    // Predicated region
    $region38: #{tpu_custom_call.1} parent=1 // pred_check
      _
    $region39: #{tpu_custom_call.1} parent=1 // pred_check_branch
      %523 = sbr.rel (0) target = $region41
    $region40: #{tpu_custom_call.1} parent=1 // pred_region
      %s525 = ssub.s32 96, 96
      %526 = vsyncadd [#allocation4], %s525
      %s528 = sshll.u32 [#allocation8], 4
      %s529 = int_to_ptr.vmem [resolvable:$true] %s528
      %531 = dma.vmem_to_hbm [thread:$0]  %s529, 96, %s6, [#allocation4]
    $region41: #{tpu_custom_call.1} parent=1 // pred_fallthru
      _
    // Predicated region
    $region42: #{tpu_custom_call.1} parent=1 // pred_check
      _
    $region43: #{tpu_custom_call.1} parent=1 // pred_check_branch
      %533 = sbr.rel (0) target = $region45
    $region44: #{tpu_custom_call.1} parent=1 // pred_region
      %s535 = ssub.s32 96, 96
      %536 = vsyncadd [#allocation10], %s535
      %s538 = sshll.u32 [#allocation9], 4
      %s539 = int_to_ptr.vmem [resolvable:$true] %s538
      %541 = dma.vmem_to_hbm [thread:$0]  %s539, 96, %s7, [#allocation10]
    $region45: #{tpu_custom_call.1} parent=1 // pred_fallthru
      _
    // Predicated region
    $region46: #{tpu_custom_call.1} parent=1 // pred_check
      _
    $region47: #{tpu_custom_call.1} parent=1 // pred_check_branch
      %543 = sbr.rel (0) target = $region49
    $region48: #{tpu_custom_call.1} parent=1 // pred_region
      %544 = dma.done [#allocation4], 96
    $region49: #{tpu_custom_call.1} parent=1 // pred_fallthru
      _
    // Predicated region
    $region50: #{tpu_custom_call.1} parent=1 // pred_check
      _
    $region51: #{tpu_custom_call.1} parent=1 // pred_check_branch
      %546 = sbr.rel (0) target = $region53
    $region52: #{tpu_custom_call.1} parent=1 // pred_region
      %547 = dma.done [#allocation10], 96
    $region53: #{tpu_custom_call.1} parent=1 // pred_fallthru
      _
    %548 = vsyncpa [#allocation3], 1
    %549 = vsyncpa [#allocation6], 1
    %550 = vsyncpa [#allocation4], 1
    %551 = vsyncpa [#allocation10], 1

</llo_original>
